<compile_context>
chip_gen: v5e
topology: v5e:2x2
jax: 0.10.0
libtpu: 0.0.40
codegen_flags: <defaults>
</compile_context>

<pallas_src>
import jax
import jax.numpy as jnp
from jax import lax
from jax.experimental import pallas as pl
from jax.experimental.pallas import tpu as pltpu


INPUT_SIZE = 25
HIDDEN_SIZES = [128, 256, 128, 64]
OUT_SIZE = 1
H4_PAD = 128       # pad the 64-wide hidden layer to a full 128-lane tile
MAX_TB = 512       # batch tile for large batches


def _mlp_kernel(x_ref,
                w1_ref, b1_ref, w2_ref, b2_ref, w3_ref, b3_ref,
                w4_ref, b4_ref, w5_ref, b5_ref,
                out_ref):
    """Fused 5-layer MLP with ReLU after every Linear (incl. the last one,
    matching the torch module). bf16 MXU matmuls, f32 accumulation; bias add
    and ReLU in f32."""

    def layer(h_bf16, w_ref, b_ref):
        acc = jnp.dot(h_bf16, w_ref[...], preferred_element_type=jnp.float32)
        return jnp.maximum(acc + b_ref[...], 0.0).astype(jnp.bfloat16)

    h = x_ref[...].astype(jnp.bfloat16)          # (TB, 25)
    h = layer(h, w1_ref, b1_ref)                 # (TB, 128)  Dropout -> identity
    h = layer(h, w2_ref, b2_ref)                 # (TB, 256)
    h = layer(h, w3_ref, b3_ref)                 # (TB, 128)
    h = layer(h, w4_ref, b4_ref)                 # (TB, 128)  (64 real + 64 zero cols)

    # Final Linear(64 -> 1), transposed: (1, 128) x (TB, 128)^T -> (1, TB).
    acc5 = lax.dot_general(w5_ref[...], h,
                           dimension_numbers=(((1,), (1,)), ((), ())),
                           preferred_element_type=jnp.float32)   # (1, TB) f32
    out = jnp.maximum(acc5 + b5_ref[...], 0.0)                   # final ReLU
    out_ref[...] = out[None]                                     # (1, 1, TB)


def init_params(key):
    """Xavier-uniform weights (stored bf16 for the MXU), zero biases (f32).

    Hidden layer 4 is zero-padded 64 -> 128 columns; the final layer's weight
    is kept in torch (out, in) row-vector form, zero-padded to (1, 128)."""
    k1, k2, k3, k4, k5 = jax.random.split(key, 5)

    def xavier_t(k, fan_in, fan_out):
        # nn.init.xavier_uniform_ on a (fan_out, fan_in) torch weight,
        # returned transposed as (fan_in, fan_out) for right-multiplication.
        bound = (6.0 / (fan_in + fan_out)) ** 0.5
        w = jax.random.uniform(k, (fan_out, fan_in), jnp.float32, -bound, bound)
        return w.T

    w1 = xavier_t(k1, INPUT_SIZE, 128)                       # (25, 128)
    w2 = xavier_t(k2, 128, 256)                              # (128, 256)
    w3 = xavier_t(k3, 256, 128)                              # (256, 128)
    w4 = xavier_t(k4, 128, 64)                               # (128, 64)
    w4 = jnp.zeros((128, H4_PAD), jnp.float32).at[:, :64].set(w4)

    bound5 = (6.0 / (64 + OUT_SIZE)) ** 0.5
    w5_row = jax.random.uniform(k5, (OUT_SIZE, 64), jnp.float32, -bound5, bound5)
    w5 = jnp.zeros((OUT_SIZE, H4_PAD), jnp.float32).at[:, :64].set(w5_row)

    b1 = jnp.zeros((1, 128), jnp.float32)
    b2 = jnp.zeros((1, 256), jnp.float32)
    b3 = jnp.zeros((1, 128), jnp.float32)
    b4 = jnp.zeros((1, H4_PAD), jnp.float32)
    b5 = jnp.zeros((1, 1), jnp.float32)

    bf = lambda w: w.astype(jnp.bfloat16)
    return [(bf(w1), b1), (bf(w2), b2), (bf(w3), b3), (bf(w4), b4), (bf(w5), b5)]


def _round_up(n, m):
    return ((n + m - 1) // m) * m


def _pick_tile(batch):
    if batch >= 2 * MAX_TB:
        return MAX_TB
    # Keep >= 2 grid steps whenever possible so both v7x TensorCores get work.
    half = -(-batch // 2)
    return min(MAX_TB, max(8, _round_up(half, 8)))


@jax.jit
def distance_adaptive_weight_network(x, params):
    """x: (B, 25) -> (B, 1) float32 (inference / eval semantics)."""
    B = x.shape[0]
    tb = _pick_tile(B)
    num_tiles = pl.cdiv(B, tb)

    # No batch padding: the ragged last input block reads unspecified rows,
    # which only affect rows that are sliced off below.
    x32 = x.astype(jnp.float32)

    (w1, b1), (w2, b2), (w3, b3), (w4, b4), (w5, b5) = params

    full = lambda arr: pl.BlockSpec(arr.shape, lambda i: (0, 0))

    out_tiles = pl.pallas_call(
        _mlp_kernel,
        out_shape=jax.ShapeDtypeStruct((num_tiles, 1, tb), jnp.float32),
        grid_spec=pltpu.PrefetchScalarGridSpec(
            num_scalar_prefetch=0,
            grid=(num_tiles,),
            in_specs=[
                pl.BlockSpec((tb, INPUT_SIZE), lambda i: (i, 0)),
                full(w1), full(b1),
                full(w2), full(b2),
                full(w3), full(b3),
                full(w4), full(b4),
                full(w5), full(b5),
            ],
            out_specs=pl.BlockSpec((1, 1, tb), lambda i: (i, 0, 0)),
        ),
        compiler_params=pltpu.CompilerParams(
            dimension_semantics=("parallel",)),
    )(x32, w1, b1, w2, b2, w3, b3, w4, b4, w5, b5)

    return out_tiles.reshape(-1)[:B][:, None]


def _reference(x, params):
    """Pure-JAX reference with the same numerics (bf16 matmul, f32 acc)."""
    (w1, b1), (w2, b2), (w3, b3), (w4, b4), (w5, b5) = params
    h = x.astype(jnp.float32)
    for w, b in ((w1, b1), (w2, b2), (w3, b3), (w4, b4)):
        acc = jnp.dot(h.astype(jnp.bfloat16), w, preferred_element_type=jnp.float32)
        h = jnp.maximum(acc + b, 0.0)
    acc = jnp.dot(h.astype(jnp.bfloat16), w5.T, preferred_element_type=jnp.float32)
    return jnp.maximum(acc + b5, 0.0)    # (B, 1)


if __name__ == "__main__":
    key = jax.random.PRNGKey(0)
    k_small, k_big = jax.random.split(key)
    params = init_params(jax.random.PRNGKey(42))

    # Small ragged batch: tb=8, grid=2, ragged last input block.
    batch = 13
    x = jax.random.normal(k_small, (batch, INPUT_SIZE), jnp.float32)
    out = jax.block_until_ready(distance_adaptive_weight_network(x, params))
    ref = _reference(x, params)
    assert out.shape == (batch, OUT_SIZE)
    assert jnp.allclose(out, ref, atol=2e-3, rtol=2e-3), "mismatch (small batch)"

    # Larger batch: tb=192, grid=2 (exercises multi-step grid + row output).
    batch2 = 384
    x2 = jax.random.normal(k_big, (batch2, INPUT_SIZE), jnp.float32)
    out2 = jax.block_until_ready(distance_adaptive_weight_network(x2, params))
    ref2 = _reference(x2, params)
    assert out2.shape == (batch2, OUT_SIZE)
    assert jnp.allclose(out2, ref2, atol=2e-3, rtol=2e-3), "mismatch (large batch)"

    print("KERNEL_OK")
</pallas_src>

<mosaic_0001>
module attributes {stable_mosaic.version = 11 : i64} {
  func.func @_mlp_kernel(%arg0: i32, %arg1: memref<8x25xf32, #tpu.memory_space<vmem>>, %arg2: memref<25x128xbf16, #tpu.memory_space<vmem>>, %arg3: memref<1x128xf32, #tpu.memory_space<vmem>>, %arg4: memref<128x256xbf16, #tpu.memory_space<vmem>>, %arg5: memref<1x256xf32, #tpu.memory_space<vmem>>, %arg6: memref<256x128xbf16, #tpu.memory_space<vmem>>, %arg7: memref<1x128xf32, #tpu.memory_space<vmem>>, %arg8: memref<128x128xbf16, #tpu.memory_space<vmem>>, %arg9: memref<1x128xf32, #tpu.memory_space<vmem>>, %arg10: memref<1x128xbf16, #tpu.memory_space<vmem>>, %arg11: memref<1x1xf32, #tpu.memory_space<vmem>>, %arg12: memref<1x1x8xf32, #tpu.memory_space<vmem>>) attributes {dimension_semantics = [#tpu.dimension_semantics<parallel>], iteration_bounds = array<i64: 2>, scalar_prefetch = 0 : i64, scratch_operands = 0 : i64, tpu.core_type = #tpu.core_type<tc>, window_params = [{transform_indices = @transform_0, window_bounds = array<i64: 8, 25>}, {pipeline_mode = #tpu.pipeline_mode<synchronous>, transform_indices = @transform_1, window_bounds = array<i64: 25, 128>}, {pipeline_mode = #tpu.pipeline_mode<synchronous>, transform_indices = @transform_2, window_bounds = array<i64: 1, 128>}, {pipeline_mode = #tpu.pipeline_mode<synchronous>, transform_indices = @transform_3, window_bounds = array<i64: 128, 256>}, {pipeline_mode = #tpu.pipeline_mode<synchronous>, transform_indices = @transform_4, window_bounds = array<i64: 1, 256>}, {pipeline_mode = #tpu.pipeline_mode<synchronous>, transform_indices = @transform_5, window_bounds = array<i64: 256, 128>}, {pipeline_mode = #tpu.pipeline_mode<synchronous>, transform_indices = @transform_6, window_bounds = array<i64: 1, 128>}, {pipeline_mode = #tpu.pipeline_mode<synchronous>, transform_indices = @transform_7, window_bounds = array<i64: 128, 128>}, {pipeline_mode = #tpu.pipeline_mode<synchronous>, transform_indices = @transform_8, window_bounds = array<i64: 1, 128>}, {pipeline_mode = #tpu.pipeline_mode<synchronous>, transform_indices = @transform_9, window_bounds = array<i64: 1, 128>}, {pipeline_mode = #tpu.pipeline_mode<synchronous>, transform_indices = @transform_10, window_bounds = array<i64: 1, 1>}, {transform_indices = @transform_11, window_bounds = array<i64: 1, 1, 8>}]} {
    %c0 = arith.constant 0 : index
    %c0_0 = arith.constant 0 : index
    %0 = vector.load %arg1[%c0, %c0_0] : memref<8x25xf32, #tpu.memory_space<vmem>>, vector<8x25xf32>
    %1 = arith.truncf %0 : vector<8x25xf32> to vector<8x25xbf16>
    %c0_1 = arith.constant 0 : index
    %c0_2 = arith.constant 0 : index
    %2 = vector.load %arg2[%c0_1, %c0_2] : memref<25x128xbf16, #tpu.memory_space<vmem>>, vector<25x128xbf16>
    %cst = arith.constant dense<0.000000e+00> : vector<8x128xf32>
    %3 = tpu.matmul %1, %2, %cst {dimension_numbers = #tpu.dot_dimension_numbers<[1], [0], [0], [1], [0, 0, 1, 1], [], []>} : vector<8x25xbf16>, vector<25x128xbf16>, vector<8x128xf32> -> vector<8x128xf32>
    %c0_3 = arith.constant 0 : index
    %c0_4 = arith.constant 0 : index
    %4 = vector.load %arg3[%c0_3, %c0_4] : memref<1x128xf32, #tpu.memory_space<vmem>>, vector<1x128xf32>
    %5 = vector.broadcast %4 : vector<1x128xf32> to vector<8x128xf32>
    %6 = arith.addf %3, %5 : vector<8x128xf32>
    %cst_5 = arith.constant 0.000000e+00 : f32
    %7 = vector.broadcast %cst_5 : f32 to vector<8x128xf32>
    %8 = arith.maximumf %6, %7 : vector<8x128xf32>
    %9 = arith.truncf %8 : vector<8x128xf32> to vector<8x128xbf16>
    %c0_6 = arith.constant 0 : index
    %c0_7 = arith.constant 0 : index
    %10 = vector.load %arg4[%c0_6, %c0_7] : memref<128x256xbf16, #tpu.memory_space<vmem>>, vector<128x256xbf16>
    %cst_8 = arith.constant dense<0.000000e+00> : vector<8x256xf32>
    %11 = tpu.matmul %9, %10, %cst_8 {dimension_numbers = #tpu.dot_dimension_numbers<[1], [0], [0], [1], [0, 0, 1, 1], [], []>} : vector<8x128xbf16>, vector<128x256xbf16>, vector<8x256xf32> -> vector<8x256xf32>
    %c0_9 = arith.constant 0 : index
    %c0_10 = arith.constant 0 : index
    %12 = vector.load %arg5[%c0_9, %c0_10] : memref<1x256xf32, #tpu.memory_space<vmem>>, vector<1x256xf32>
    %13 = vector.broadcast %12 : vector<1x256xf32> to vector<8x256xf32>
    %14 = arith.addf %11, %13 : vector<8x256xf32>
    %cst_11 = arith.constant 0.000000e+00 : f32
    %15 = vector.broadcast %cst_11 : f32 to vector<8x256xf32>
    %16 = arith.maximumf %14, %15 : vector<8x256xf32>
    %17 = arith.truncf %16 : vector<8x256xf32> to vector<8x256xbf16>
    %c0_12 = arith.constant 0 : index
    %c0_13 = arith.constant 0 : index
    %18 = vector.load %arg6[%c0_12, %c0_13] : memref<256x128xbf16, #tpu.memory_space<vmem>>, vector<256x128xbf16>
    %cst_14 = arith.constant dense<0.000000e+00> : vector<8x128xf32>
    %19 = tpu.matmul %17, %18, %cst_14 {dimension_numbers = #tpu.dot_dimension_numbers<[1], [0], [0], [1], [0, 0, 1, 1], [], []>} : vector<8x256xbf16>, vector<256x128xbf16>, vector<8x128xf32> -> vector<8x128xf32>
    %c0_15 = arith.constant 0 : index
    %c0_16 = arith.constant 0 : index
    %20 = vector.load %arg7[%c0_15, %c0_16] : memref<1x128xf32, #tpu.memory_space<vmem>>, vector<1x128xf32>
    %21 = vector.broadcast %20 : vector<1x128xf32> to vector<8x128xf32>
    %22 = arith.addf %19, %21 : vector<8x128xf32>
    %cst_17 = arith.constant 0.000000e+00 : f32
    %23 = vector.broadcast %cst_17 : f32 to vector<8x128xf32>
    %24 = arith.maximumf %22, %23 : vector<8x128xf32>
    %25 = arith.truncf %24 : vector<8x128xf32> to vector<8x128xbf16>
    %c0_18 = arith.constant 0 : index
    %c0_19 = arith.constant 0 : index
    %26 = vector.load %arg8[%c0_18, %c0_19] : memref<128x128xbf16, #tpu.memory_space<vmem>>, vector<128x128xbf16>
    %cst_20 = arith.constant dense<0.000000e+00> : vector<8x128xf32>
    %27 = tpu.matmul %25, %26, %cst_20 {dimension_numbers = #tpu.dot_dimension_numbers<[1], [0], [0], [1], [0, 0, 1, 1], [], []>} : vector<8x128xbf16>, vector<128x128xbf16>, vector<8x128xf32> -> vector<8x128xf32>
    %c0_21 = arith.constant 0 : index
    %c0_22 = arith.constant 0 : index
    %28 = vector.load %arg9[%c0_21, %c0_22] : memref<1x128xf32, #tpu.memory_space<vmem>>, vector<1x128xf32>
    %29 = vector.broadcast %28 : vector<1x128xf32> to vector<8x128xf32>
    %30 = arith.addf %27, %29 : vector<8x128xf32>
    %cst_23 = arith.constant 0.000000e+00 : f32
    %31 = vector.broadcast %cst_23 : f32 to vector<8x128xf32>
    %32 = arith.maximumf %30, %31 : vector<8x128xf32>
    %33 = arith.truncf %32 : vector<8x128xf32> to vector<8x128xbf16>
    %c0_24 = arith.constant 0 : index
    %c0_25 = arith.constant 0 : index
    %34 = vector.load %arg10[%c0_24, %c0_25] : memref<1x128xbf16, #tpu.memory_space<vmem>>, vector<1x128xbf16>
    %cst_26 = arith.constant dense<0.000000e+00> : vector<1x8xf32>
    %35 = tpu.matmul %34, %33, %cst_26 {dimension_numbers = #tpu.dot_dimension_numbers<[1], [1], [0], [0], [0, 0, 1, 0], [], []>} : vector<1x128xbf16>, vector<8x128xbf16>, vector<1x8xf32> -> vector<1x8xf32>
    %c0_27 = arith.constant 0 : index
    %c0_28 = arith.constant 0 : index
    %36 = vector.load %arg11[%c0_27, %c0_28] : memref<1x1xf32, #tpu.memory_space<vmem>>, vector<1x1xf32>
    %37 = vector.broadcast %36 : vector<1x1xf32> to vector<1x8xf32>
    %38 = arith.addf %35, %37 : vector<1x8xf32>
    %cst_29 = arith.constant 0.000000e+00 : f32
    %39 = vector.broadcast %cst_29 : f32 to vector<1x8xf32>
    %40 = arith.maximumf %38, %39 : vector<1x8xf32>
    %41 = vector.shape_cast %40 : vector<1x8xf32> to vector<1x1x8xf32>
    %c0_30 = arith.constant 0 : index
    %c0_31 = arith.constant 0 : index
    %c0_32 = arith.constant 0 : index
    %42 = vector.load %arg12[%c0_30, %c0_31, %c0_32] : memref<1x1x8xf32, #tpu.memory_space<vmem>>, vector<1x1x8xf32>
    tpu.vector_store %arg12[%c0_30, %c0_31, %c0_32], %41 {strides = array<i32>} : memref<1x1x8xf32, #tpu.memory_space<vmem>>, vector<1x1x8xf32>,
    return
  }
  func.func @transform_0(%arg0: i32) -> (i32, i32) {
    %c0_i32 = arith.constant 0 : i32
    %c0_i32_0 = arith.constant 0 : i32
    return %arg0, %c0_i32 : i32, i32
  }
  func.func @transform_1(%arg0: i32) -> (i32, i32) {
    %c0_i32 = arith.constant 0 : i32
    %c0_i32_0 = arith.constant 0 : i32
    %c0_i32_1 = arith.constant 0 : i32
    return %c0_i32, %c0_i32_0 : i32, i32
  }
  func.func @transform_2(%arg0: i32) -> (i32, i32) {
    %c0_i32 = arith.constant 0 : i32
    %c0_i32_0 = arith.constant 0 : i32
    %c0_i32_1 = arith.constant 0 : i32
    return %c0_i32, %c0_i32_0 : i32, i32
  }
  func.func @transform_3(%arg0: i32) -> (i32, i32) {
    %c0_i32 = arith.constant 0 : i32
    %c0_i32_0 = arith.constant 0 : i32
    %c0_i32_1 = arith.constant 0 : i32
    return %c0_i32, %c0_i32_0 : i32, i32
  }
  func.func @transform_4(%arg0: i32) -> (i32, i32) {
    %c0_i32 = arith.constant 0 : i32
    %c0_i32_0 = arith.constant 0 : i32
    %c0_i32_1 = arith.constant 0 : i32
    return %c0_i32, %c0_i32_0 : i32, i32
  }
  func.func @transform_5(%arg0: i32) -> (i32, i32) {
    %c0_i32 = arith.constant 0 : i32
    %c0_i32_0 = arith.constant 0 : i32
    %c0_i32_1 = arith.constant 0 : i32
    return %c0_i32, %c0_i32_0 : i32, i32
  }
  func.func @transform_6(%arg0: i32) -> (i32, i32) {
    %c0_i32 = arith.constant 0 : i32
    %c0_i32_0 = arith.constant 0 : i32
    %c0_i32_1 = arith.constant 0 : i32
    return %c0_i32, %c0_i32_0 : i32, i32
  }
  func.func @transform_7(%arg0: i32) -> (i32, i32) {
    %c0_i32 = arith.constant 0 : i32
    %c0_i32_0 = arith.constant 0 : i32
    %c0_i32_1 = arith.constant 0 : i32
    return %c0_i32, %c0_i32_0 : i32, i32
  }
  func.func @transform_8(%arg0: i32) -> (i32, i32) {
    %c0_i32 = arith.constant 0 : i32
    %c0_i32_0 = arith.constant 0 : i32
    %c0_i32_1 = arith.constant 0 : i32
    return %c0_i32, %c0_i32_0 : i32, i32
  }
  func.func @transform_9(%arg0: i32) -> (i32, i32) {
    %c0_i32 = arith.constant 0 : i32
    %c0_i32_0 = arith.constant 0 : i32
    %c0_i32_1 = arith.constant 0 : i32
    return %c0_i32, %c0_i32_0 : i32, i32
  }
  func.func @transform_10(%arg0: i32) -> (i32, i32) {
    %c0_i32 = arith.constant 0 : i32
    %c0_i32_0 = arith.constant 0 : i32
    %c0_i32_1 = arith.constant 0 : i32
    return %c0_i32, %c0_i32_0 : i32, i32
  }
  func.func @transform_11(%arg0: i32) -> (i32, i32, i32) {
    %c0_i32 = arith.constant 0 : i32
    %c0_i32_0 = arith.constant 0 : i32
    %c0_i32_1 = arith.constant 0 : i32
    return %arg0, %c0_i32, %c0_i32_0 : i32, i32, i32
  }
}

</mosaic_0001>

<llo_original>
// kernel: distance_adaptive_weight_network.1
$region0: #{distance_adaptive_weight_network.1}
  #allocation0 [shape = 'u32[]', space=smem, size = 0x4, offset = 0x4, fixed_abs, tag = 'smem constant byte address 0x4 - core index']
  #allocation1 [shape = 'u32[72,128]{1,0:T(1,128)}', space=vmem, size = 0x9000, scoped, tag = 'internal scratch']
  #allocation2 [shape = 'f32[1,1]{1,0:T(1,128)S(1)}', space=vmem, size = 0x200, scoped, tag = 'scoped memory for distance_adaptive_weight_network.1']
  %s0 = inlined_call_operand.hbm [shape: f32[13,25], index: 0, kind: input, shape index: {}]
  %s1 = inlined_call_operand.hbm [shape: bf16[25,128], index: 1, kind: input, shape index: {}]
  %s2 = inlined_call_operand.vmem [shape: f32[1,128], index: 2, kind: input, shape index: {}]
  %s3 = inlined_call_operand.hbm [shape: bf16[128,256], index: 3, kind: input, shape index: {}]
  %s4 = inlined_call_operand.vmem [shape: f32[1,256], index: 4, kind: input, shape index: {}]
  %s5 = inlined_call_operand.hbm [shape: bf16[256,128], index: 5, kind: input, shape index: {}]
  %s6 = inlined_call_operand.vmem [shape: f32[1,128], index: 6, kind: input, shape index: {}]
  %s7 = inlined_call_operand.hbm [shape: bf16[128,128], index: 7, kind: input, shape index: {}]
  %s8 = inlined_call_operand.vmem [shape: f32[1,128], index: 8, kind: input, shape index: {}]
  %s9 = inlined_call_operand.vmem [shape: bf16[1,128], index: 9, kind: input, shape index: {}]
  %s10 = inlined_call_operand.<no memory space> [shape: f32[1,1], index: 10, kind: input, shape index: {}]
  %s11 = inlined_call_operand.vmem [shape: f32[2,1,8], index: 11, kind: output, shape index: {}]
  %s12 = sld [smem:[#allocation0]]
  $region97: #{distance_adaptive_weight_network.1} parent=0
    _
  %s14 = ssub.s32 1, %s12
  %s15 = scalar_select 0, %s14, %s12
  %v16 = vstv %s10
  %17 = vst [vmem:[#allocation2] sm:$0x1] %v16
  $region1: #{distance_adaptive_weight_network.1} parent=0
    #allocation3 [shape = 'u8[8192]{0}', space=vmem, size = 0x2000, scoped, tag = 'input window, operand 0']
    #allocation4 [shape = 's32[2]{0}', space=sflag, size = 0x8, scoped, tag = 'scoped memory for distance_adaptive_weight_network.1']
    #allocation5 [shape = 'u8[8192]{0}', space=vmem, size = 0x2000, scoped, tag = 'input window, operand 1, single buffered']
    #allocation6 [shape = 's32[1]{0}', space=sflag, size = 0x4, scoped, tag = 'scoped memory for distance_adaptive_weight_network.1']
    #allocation7 [shape = 'u8[65536]{0}', space=vmem, size = 0x10000, scoped, tag = 'input window, operand 3, single buffered']
    #allocation8 [shape = 'u8[65536]{0}', space=vmem, size = 0x10000, scoped, tag = 'input window, operand 5, single buffered']
    #allocation9 [shape = 's32[1]{0}', space=sflag, size = 0x4, scoped, tag = 'scoped memory for distance_adaptive_weight_network.1']
    #allocation10 [shape = 'u8[32768]{0}', space=vmem, size = 0x8000, scoped, tag = 'input window, operand 7, single buffered']
    %18 = vsyncpa [#allocation4], 0
    %s19 = scalar_lea.sflag [#allocation4], 1
    %20 = vsyncpa %s19, 0
    %21 = vsyncpa [#allocation6], 0
    %22 = vsyncpa [#allocation9], 0
    loop: start=0, step=1, limit=4
    $region2: #{distance_adaptive_weight_network.1} parent=1 // loop_pre_header
      _
    $region3: #{distance_adaptive_weight_network.1} parent=1 // loop_header
      %s24 = sphi 0, %s28
      %p25 = scmp.ge.s32.totalorder %s24, 4
      %s34 = sphi 0, %s36
      %s37 = sphi 0, %s34
      %s38 = sphi 0, %s37
      %s54 = sphi 0, %s38
      %s58 = sphi 0, %s58
      %s60 = sphi 0, %s58
      %s61 = sphi 0, %s60
      %s75 = sphi 0, %s61
      %s79 = sphi 0, %s79
      %s81 = sphi 0, %s79
      %s82 = sphi 0, %s81
      %s96 = sphi 0, %s82
      %s100 = sphi 0, %s100
      %s102 = sphi 0, %s100
      %s103 = sphi 0, %s102
      %s117 = sphi 0, %s103
      %s121 = sphi 0, %s121
      %s123 = sphi 0, %s121
      %s124 = sphi 0, %s123
      %s138 = sphi 0, %s124
      %s142 = sphi 0, %s142
      %s144 = sphi 0, %s142
      %s145 = sphi 0, %s144
      %s159 = sphi 0, %s145
      %s163 = sphi 0, %s163
      %s165 = sphi 0, %s163
      %s166 = sphi 0, %s165
      %s180 = sphi 0, %s166
      %s184 = sphi 0, %s184
      %s186 = sphi 0, %s184
      %s187 = sphi 0, %s186
      %s201 = sphi 0, %s187
      %s205 = sphi 0, %s205
      %s207 = sphi 0, %s205
      %s208 = sphi 0, %s207
      %s222 = sphi 0, %s208
      %s226 = sphi 0, %s226
      %s228 = sphi 0, %s226
      %s229 = sphi 0, %s228
      %s243 = sphi 0, %s229
      %s247 = sphi 0, %s247
      %s249 = sphi 0, %s247
      %s250 = sphi 0, %s249
      %s264 = sphi 0, %s250
      %s270 = sphi 0, %s272
      %s273 = sphi 0, %s270
      %s274 = sphi 0, %s273
      %s290 = sphi 0, %s274
    $region4: #{distance_adaptive_weight_network.1} parent=1 // loop_header_branch
      %27 = sbr.rel (%p25) target = $region8
    $region5: #{distance_adaptive_weight_network.1} parent=1 // loop_body
      %s29 = ssub.s32 %s24, 1
      %s30 = ssub.s32 %s24, 2
      %s31 = sadd.s32 %s24, 1
      %s32 = ssub.s32 %s24, %s31
      %p33 = scmp.eq.s32.totalorder %s32, 0
      %s35 = sadd.s32 %s34, 1
      %s36 = scalar_select %p33, %s34, %s35
      %p39 = pneg %p33
      %p40 = scmp.eq.s32.totalorder %s24, 1
      %p41 = por %p39, %p40
      %p42 = scmp.ne.s32.totalorder %s34, %s37
      %p43 = scmp.eq.s32.totalorder %s24, 0
      %p44 = por %p42, %p43
      %p45 = scmp.ne.s32.totalorder %s34, %s37
      %p46 = scmp.eq.s32.totalorder %s29, 1
      %p47 = por %p45, %p46
      %p48 = scmp.ne.s32.totalorder %s37, %s38
      %p49 = scmp.eq.s32.totalorder %s29, 0
      %p50 = por %p48, %p49
      %p51 = scmp.ne.s32.totalorder %s37, %s38
      %p52 = scmp.eq.s32.totalorder %s30, 1
      %p53 = por %p51, %p52
      %p55 = scmp.ne.s32.totalorder %s38, %s54
      %p56 = scmp.eq.s32.totalorder %s30, 0
      %p57 = por %p55, %p56
      %s59 = sadd.s32 %s58, 1
      %p62 = scmp.eq.s32.totalorder %s24, 1
      %p63 = scmp.ne.s32.totalorder %s58, %s60
      %p64 = scmp.eq.s32.totalorder %s24, 0
      %p65 = por %p63, %p64
      %p66 = scmp.ne.s32.totalorder %s58, %s60
      %p67 = scmp.eq.s32.totalorder %s29, 1
      %p68 = por %p66, %p67
      %p69 = scmp.ne.s32.totalorder %s60, %s61
      %p70 = scmp.eq.s32.totalorder %s29, 0
      %p71 = por %p69, %p70
      %p72 = scmp.ne.s32.totalorder %s60, %s61
      %p73 = scmp.eq.s32.totalorder %s30, 1
      %p74 = por %p72, %p73
      %p76 = scmp.ne.s32.totalorder %s61, %s75
      %p77 = scmp.eq.s32.totalorder %s30, 0
      %p78 = por %p76, %p77
      %s80 = sadd.s32 %s79, 1
      %p83 = scmp.eq.s32.totalorder %s24, 1
      %p84 = scmp.ne.s32.totalorder %s79, %s81
      %p85 = scmp.eq.s32.totalorder %s24, 0
      %p86 = por %p84, %p85
      %p87 = scmp.ne.s32.totalorder %s79, %s81
      %p88 = scmp.eq.s32.totalorder %s29, 1
      %p89 = por %p87, %p88
      %p90 = scmp.ne.s32.totalorder %s81, %s82
      %p91 = scmp.eq.s32.totalorder %s29, 0
      %p92 = por %p90, %p91
      %p93 = scmp.ne.s32.totalorder %s81, %s82
      %p94 = scmp.eq.s32.totalorder %s30, 1
      %p95 = por %p93, %p94
      %p97 = scmp.ne.s32.totalorder %s82, %s96
      %p98 = scmp.eq.s32.totalorder %s30, 0
      %p99 = por %p97, %p98
      %s101 = sadd.s32 %s100, 1
      %p104 = scmp.eq.s32.totalorder %s24, 1
      %p105 = scmp.ne.s32.totalorder %s100, %s102
      %p106 = scmp.eq.s32.totalorder %s24, 0
      %p107 = por %p105, %p106
      %p108 = scmp.ne.s32.totalorder %s100, %s102
      %p109 = scmp.eq.s32.totalorder %s29, 1
      %p110 = por %p108, %p109
      %p111 = scmp.ne.s32.totalorder %s102, %s103
      %p112 = scmp.eq.s32.totalorder %s29, 0
      %p113 = por %p111, %p112
      %p114 = scmp.ne.s32.totalorder %s102, %s103
      %p115 = scmp.eq.s32.totalorder %s30, 1
      %p116 = por %p114, %p115
      %p118 = scmp.ne.s32.totalorder %s103, %s117
      %p119 = scmp.eq.s32.totalorder %s30, 0
      %p120 = por %p118, %p119
      %s122 = sadd.s32 %s121, 1
      %p125 = scmp.eq.s32.totalorder %s24, 1
      %p126 = scmp.ne.s32.totalorder %s121, %s123
      %p127 = scmp.eq.s32.totalorder %s24, 0
      %p128 = por %p126, %p127
      %p129 = scmp.ne.s32.totalorder %s121, %s123
      %p130 = scmp.eq.s32.totalorder %s29, 1
      %p131 = por %p129, %p130
      %p132 = scmp.ne.s32.totalorder %s123, %s124
      %p133 = scmp.eq.s32.totalorder %s29, 0
      %p134 = por %p132, %p133
      %p135 = scmp.ne.s32.totalorder %s123, %s124
      %p136 = scmp.eq.s32.totalorder %s30, 1
      %p137 = por %p135, %p136
      %p139 = scmp.ne.s32.totalorder %s124, %s138
      %p140 = scmp.eq.s32.totalorder %s30, 0
      %p141 = por %p139, %p140
      %s143 = sadd.s32 %s142, 1
      %p146 = scmp.eq.s32.totalorder %s24, 1
      %p147 = scmp.ne.s32.totalorder %s142, %s144
      %p148 = scmp.eq.s32.totalorder %s24, 0
      %p149 = por %p147, %p148
      %p150 = scmp.ne.s32.totalorder %s142, %s144
      %p151 = scmp.eq.s32.totalorder %s29, 1
      %p152 = por %p150, %p151
      %p153 = scmp.ne.s32.totalorder %s144, %s145
      %p154 = scmp.eq.s32.totalorder %s29, 0
      %p155 = por %p153, %p154
      %p156 = scmp.ne.s32.totalorder %s144, %s145
      %p157 = scmp.eq.s32.totalorder %s30, 1
      %p158 = por %p156, %p157
      %p160 = scmp.ne.s32.totalorder %s145, %s159
      %p161 = scmp.eq.s32.totalorder %s30, 0
      %p162 = por %p160, %p161
      %s164 = sadd.s32 %s163, 1
      %p167 = scmp.eq.s32.totalorder %s24, 1
      %p168 = scmp.ne.s32.totalorder %s163, %s165
      %p169 = scmp.eq.s32.totalorder %s24, 0
      %p170 = por %p168, %p169
      %p171 = scmp.ne.s32.totalorder %s163, %s165
      %p172 = scmp.eq.s32.totalorder %s29, 1
      %p173 = por %p171, %p172
      %p174 = scmp.ne.s32.totalorder %s165, %s166
      %p175 = scmp.eq.s32.totalorder %s29, 0
      %p176 = por %p174, %p175
      %p177 = scmp.ne.s32.totalorder %s165, %s166
      %p178 = scmp.eq.s32.totalorder %s30, 1
      %p179 = por %p177, %p178
      %p181 = scmp.ne.s32.totalorder %s166, %s180
      %p182 = scmp.eq.s32.totalorder %s30, 0
      %p183 = por %p181, %p182
      %s185 = sadd.s32 %s184, 1
      %p188 = scmp.eq.s32.totalorder %s24, 1
      %p189 = scmp.ne.s32.totalorder %s184, %s186
      %p190 = scmp.eq.s32.totalorder %s24, 0
      %p191 = por %p189, %p190
      %p192 = scmp.ne.s32.totalorder %s184, %s186
      %p193 = scmp.eq.s32.totalorder %s29, 1
      %p194 = por %p192, %p193
      %p195 = scmp.ne.s32.totalorder %s186, %s187
      %p196 = scmp.eq.s32.totalorder %s29, 0
      %p197 = por %p195, %p196
      %p198 = scmp.ne.s32.totalorder %s186, %s187
      %p199 = scmp.eq.s32.totalorder %s30, 1
      %p200 = por %p198, %p199
      %p202 = scmp.ne.s32.totalorder %s187, %s201
      %p203 = scmp.eq.s32.totalorder %s30, 0
      %p204 = por %p202, %p203
      %s206 = sadd.s32 %s205, 1
      %p209 = scmp.eq.s32.totalorder %s24, 1
      %p210 = scmp.ne.s32.totalorder %s205, %s207
      %p211 = scmp.eq.s32.totalorder %s24, 0
      %p212 = por %p210, %p211
      %p213 = scmp.ne.s32.totalorder %s205, %s207
      %p214 = scmp.eq.s32.totalorder %s29, 1
      %p215 = por %p213, %p214
      %p216 = scmp.ne.s32.totalorder %s207, %s208
      %p217 = scmp.eq.s32.totalorder %s29, 0
      %p218 = por %p216, %p217
      %p219 = scmp.ne.s32.totalorder %s207, %s208
      %p220 = scmp.eq.s32.totalorder %s30, 1
      %p221 = por %p219, %p220
      %p223 = scmp.ne.s32.totalorder %s208, %s222
      %p224 = scmp.eq.s32.totalorder %s30, 0
      %p225 = por %p223, %p224
      %s227 = sadd.s32 %s226, 1
      %p230 = scmp.eq.s32.totalorder %s24, 1
      %p231 = scmp.ne.s32.totalorder %s226, %s228
      %p232 = scmp.eq.s32.totalorder %s24, 0
      %p233 = por %p231, %p232
      %p234 = scmp.ne.s32.totalorder %s226, %s228
      %p235 = scmp.eq.s32.totalorder %s29, 1
      %p236 = por %p234, %p235
      %p237 = scmp.ne.s32.totalorder %s228, %s229
      %p238 = scmp.eq.s32.totalorder %s29, 0
      %p239 = por %p237, %p238
      %p240 = scmp.ne.s32.totalorder %s228, %s229
      %p241 = scmp.eq.s32.totalorder %s30, 1
      %p242 = por %p240, %p241
      %p244 = scmp.ne.s32.totalorder %s229, %s243
      %p245 = scmp.eq.s32.totalorder %s30, 0
      %p246 = por %p244, %p245
      %s248 = sadd.s32 %s247, 1
      %p251 = scmp.eq.s32.totalorder %s24, 1
      %p252 = scmp.ne.s32.totalorder %s247, %s249
      %p253 = scmp.eq.s32.totalorder %s24, 0
      %p254 = por %p252, %p253
      %p255 = scmp.ne.s32.totalorder %s247, %s249
      %p256 = scmp.eq.s32.totalorder %s29, 1
      %p257 = por %p255, %p256
      %p258 = scmp.ne.s32.totalorder %s249, %s250
      %p259 = scmp.eq.s32.totalorder %s29, 0
      %p260 = por %p258, %p259
      %p261 = scmp.ne.s32.totalorder %s249, %s250
      %p262 = scmp.eq.s32.totalorder %s30, 1
      %p263 = por %p261, %p262
      %p265 = scmp.ne.s32.totalorder %s250, %s264
      %p266 = scmp.eq.s32.totalorder %s30, 0
      %p267 = por %p265, %p266
      %s268 = ssub.s32 %s24, %s31
      %p269 = scmp.eq.s32.totalorder %s268, 0
      %s271 = sadd.s32 %s270, 1
      %s272 = scalar_select %p269, %s270, %s271
      %p275 = pneg %p269
      %p276 = scmp.eq.s32.totalorder %s24, 1
      %p277 = por %p275, %p276
      %p278 = scmp.ne.s32.totalorder %s270, %s273
      %p279 = scmp.eq.s32.totalorder %s24, 0
      %p280 = por %p278, %p279
      %p281 = scmp.ne.s32.totalorder %s270, %s273
      %p282 = scmp.eq.s32.totalorder %s29, 1
      %p283 = por %p281, %p282
      %p284 = scmp.ne.s32.totalorder %s273, %s274
      %p285 = scmp.eq.s32.totalorder %s29, 0
      %p286 = por %p284, %p285
      %p287 = scmp.ne.s32.totalorder %s273, %s274
      %p288 = scmp.eq.s32.totalorder %s30, 1
      %p289 = por %p287, %p288
      %p291 = scmp.ne.s32.totalorder %s274, %s290
      %p292 = scmp.eq.s32.totalorder %s30, 0
      %p293 = por %p291, %p292
      %p294 = scmp.le.s32.totalorder 1, %s24
      %p295 = scmp.lt.s32.totalorder %s24, 3
      %p296 = pnand %p294, %p295
      %p297 = pneg %p296
      // Predicated region
      $region9: #{distance_adaptive_weight_network.1} parent=5 // pred_check
        _
      $region10: #{distance_adaptive_weight_network.1} parent=5 // pred_check_branch
        %299 = sbr.rel (%p296) target = $region12
      $region11: #{distance_adaptive_weight_network.1} parent=5 // pred_region
        %s300 = ssub.s32 %s24, 1
        // Predicated region
        $region13: #{distance_adaptive_weight_network.1} parent=11 // pred_check
          %p301 = pneg %p71
        $region14: #{distance_adaptive_weight_network.1} parent=11 // pred_check_branch
          %303 = sbr.rel (%p301) target = $region16
        $region15: #{distance_adaptive_weight_network.1} parent=11 // pred_region
          %305 = vsyncadd [#allocation6], 0
          %s306 = sshll.u32 %s1, 4
          %s307 = int_to_ptr.hbm [resolvable:$true] %s306
          %s308 = sshll.u32 [#allocation5], 4
          %s309 = int_to_ptr.vmem [resolvable:$true] %s308
          %314 = dma.hbm_to_vmem [thread:$0]  %s307, 256, %s309, [#allocation6], 64, 64, 4
        $region16: #{distance_adaptive_weight_network.1} parent=11 // pred_fallthru
          _
        // Predicated region
        $region17: #{distance_adaptive_weight_network.1} parent=11 // pred_check
          %p315 = pneg %p92
        $region18: #{distance_adaptive_weight_network.1} parent=11 // pred_check_branch
          %317 = sbr.rel (%p315) target = $region20
        $region19: #{distance_adaptive_weight_network.1} parent=11 // pred_region
          _
        $region20: #{distance_adaptive_weight_network.1} parent=11 // pred_fallthru
          _
        // Predicated region
        $region21: #{distance_adaptive_weight_network.1} parent=11 // pred_check
          %p318 = pneg %p113
        $region22: #{distance_adaptive_weight_network.1} parent=11 // pred_check_branch
          %320 = sbr.rel (%p318) target = $region24
        $region23: #{distance_adaptive_weight_network.1} parent=11 // pred_region
          %322 = vsyncadd [#allocation6], 0
          %s323 = sshll.u32 %s3, 4
          %s324 = int_to_ptr.hbm [resolvable:$true] %s323
          %s325 = sshll.u32 [#allocation7], 4
          %s326 = int_to_ptr.vmem [resolvable:$true] %s325
          %331 = dma.hbm_to_vmem [thread:$0]  %s324, 2048, %s326, [#allocation6], 128, 128, 8
        $region24: #{distance_adaptive_weight_network.1} parent=11 // pred_fallthru
          _
        // Predicated region
        $region25: #{distance_adaptive_weight_network.1} parent=11 // pred_check
          %p332 = pneg %p134
        $region26: #{distance_adaptive_weight_network.1} parent=11 // pred_check_branch
          %334 = sbr.rel (%p332) target = $region28
        $region27: #{distance_adaptive_weight_network.1} parent=11 // pred_region
          _
        $region28: #{distance_adaptive_weight_network.1} parent=11 // pred_fallthru
          _
        // Predicated region
        $region29: #{distance_adaptive_weight_network.1} parent=11 // pred_check
          %p335 = pneg %p155
        $region30: #{distance_adaptive_weight_network.1} parent=11 // pred_check_branch
          %337 = sbr.rel (%p335) target = $region32
        $region31: #{distance_adaptive_weight_network.1} parent=11 // pred_region
          %339 = vsyncadd [#allocation9], 0
          %s340 = sshll.u32 %s5, 4
          %s341 = int_to_ptr.hbm [resolvable:$true] %s340
          %s342 = sshll.u32 [#allocation8], 4
          %s343 = int_to_ptr.vmem [resolvable:$true] %s342
          %348 = dma.hbm_to_vmem [thread:$0]  %s341, 2048, %s343, [#allocation9], 64, 64, 4
        $region32: #{distance_adaptive_weight_network.1} parent=11 // pred_fallthru
          _
        // Predicated region
        $region33: #{distance_adaptive_weight_network.1} parent=11 // pred_check
          %p349 = pneg %p176
        $region34: #{distance_adaptive_weight_network.1} parent=11 // pred_check_branch
          %351 = sbr.rel (%p349) target = $region36
        $region35: #{distance_adaptive_weight_network.1} parent=11 // pred_region
          _
        $region36: #{distance_adaptive_weight_network.1} parent=11 // pred_fallthru
          _
        // Predicated region
        $region37: #{distance_adaptive_weight_network.1} parent=11 // pred_check
          %p352 = pneg %p197
        $region38: #{distance_adaptive_weight_network.1} parent=11 // pred_check_branch
          %354 = sbr.rel (%p352) target = $region40
        $region39: #{distance_adaptive_weight_network.1} parent=11 // pred_region
          %356 = vsyncadd [#allocation9], 0
          %s357 = sshll.u32 %s7, 4
          %s358 = int_to_ptr.hbm [resolvable:$true] %s357
          %s359 = sshll.u32 [#allocation10], 4
          %s360 = int_to_ptr.vmem [resolvable:$true] %s359
          %365 = dma.hbm_to_vmem [thread:$0]  %s358, 1024, %s360, [#allocation9], 64, 64, 4
        $region40: #{distance_adaptive_weight_network.1} parent=11 // pred_fallthru
          _
        // Predicated region
        $region41: #{distance_adaptive_weight_network.1} parent=11 // pred_check
          %p366 = pneg %p218
        $region42: #{distance_adaptive_weight_network.1} parent=11 // pred_check_branch
          %368 = sbr.rel (%p366) target = $region44
        $region43: #{distance_adaptive_weight_network.1} parent=11 // pred_region
          _
        $region44: #{distance_adaptive_weight_network.1} parent=11 // pred_fallthru
          _
        // Predicated region
        $region45: #{distance_adaptive_weight_network.1} parent=11 // pred_check
          %p369 = pneg %p239
        $region46: #{distance_adaptive_weight_network.1} parent=11 // pred_check_branch
          %371 = sbr.rel (%p369) target = $region48
        $region47: #{distance_adaptive_weight_network.1} parent=11 // pred_region
          _
        $region48: #{distance_adaptive_weight_network.1} parent=11 // pred_fallthru
          _
        // Predicated region
        $region49: #{distance_adaptive_weight_network.1} parent=11 // pred_check
          %p372 = pneg %p260
        $region50: #{distance_adaptive_weight_network.1} parent=11 // pred_check_branch
          %374 = sbr.rel (%p372) target = $region52
        $region51: #{distance_adaptive_weight_network.1} parent=11 // pred_region
          _
        $region52: #{distance_adaptive_weight_network.1} parent=11 // pred_fallthru
          _
      $region12: #{distance_adaptive_weight_network.1} parent=5 // pred_fallthru
        _
      %p375 = scmp.lt.s32.totalorder %s24, 2
      // Predicated region
      $region53: #{distance_adaptive_weight_network.1} parent=5 // pred_check
        %p376 = pneg %p375
      $region54: #{distance_adaptive_weight_network.1} parent=5 // pred_check_branch
        %378 = sbr.rel (%p376) target = $region56
      $region55: #{distance_adaptive_weight_network.1} parent=5 // pred_region
        // Predicated region
        $region57: #{distance_adaptive_weight_network.1} parent=55 // pred_check
          %p379 = pneg %p44
        $region58: #{distance_adaptive_weight_network.1} parent=55 // pred_check_branch
          %381 = sbr.rel (%p379) target = $region60
        $region59: #{distance_adaptive_weight_network.1} parent=55 // pred_region
          %s382 = sand.u32 %s34, 1
          %s383 = scalar_lea.sflag [#allocation4], %s382
          %s384 = sand.u32 %s34, 1
          %s385 = smul.addr %s384, 8
          %s386 = scalar_lea.vmem [#allocation3], %s385
          %388 = vsyncadd %s383, 0
          %s389 = smul.addr %s24, 8
          %s390 = scalar_lea.hbm %s0, %s389
          %s392 = sshll.u32 %s390, 4
          %s393 = int_to_ptr.hbm [resolvable:$true] %s392
          %s394 = sshll.u32 %s386, 4
          %s395 = int_to_ptr.vmem [resolvable:$true] %s394
          %397 = dma.hbm_to_vmem [thread:$0]  %s393, 128, %s395, %s383
        $region60: #{distance_adaptive_weight_network.1} parent=55 // pred_fallthru
          _
      $region56: #{distance_adaptive_weight_network.1} parent=5 // pred_fallthru
        _
      %p398 = scmp.le.s32.totalorder 1, %s24
      %p399 = scmp.lt.s32.totalorder %s24, 3
      %p400 = pnand %p398, %p399
      %p401 = pneg %p400
      // Predicated region
      $region61: #{distance_adaptive_weight_network.1} parent=5 // pred_check
        _
      $region62: #{distance_adaptive_weight_network.1} parent=5 // pred_check_branch
        %403 = sbr.rel (%p400) target = $region64
      $region63: #{distance_adaptive_weight_network.1} parent=5 // pred_region
        %s404 = ssub.s32 %s24, 1
        %s405 = sand.u32 %s37, 1
        %s406 = scalar_lea.sflag [#allocation4], %s405
        %s407 = sand.u32 %s37, 1
        %s408 = smul.addr %s407, 8
        %s409 = scalar_lea.vmem [#allocation3], %s408
        // Predicated region
        $region65: #{distance_adaptive_weight_network.1} parent=63 // pred_check
          %p410 = pneg %p50
        $region66: #{distance_adaptive_weight_network.1} parent=63 // pred_check_branch
          %412 = sbr.rel (%p410) target = $region68
        $region67: #{distance_adaptive_weight_network.1} parent=63 // pred_region
          %414 = dma.done %s406, 128
        $region68: #{distance_adaptive_weight_network.1} parent=63 // pred_fallthru
          _
        // Predicated region
        $region69: #{distance_adaptive_weight_network.1} parent=63 // pred_check
          %p415 = pneg %p71
        $region70: #{distance_adaptive_weight_network.1} parent=63 // pred_check_branch
          %417 = sbr.rel (%p415) target = $region72
        $region71: #{distance_adaptive_weight_network.1} parent=63 // pred_region
          %419 = dma.done [#allocation6], 256
        $region72: #{distance_adaptive_weight_network.1} parent=63 // pred_fallthru
          _
        // Predicated region
        $region73: #{distance_adaptive_weight_network.1} parent=63 // pred_check
          %p420 = pneg %p113
        $region74: #{distance_adaptive_weight_network.1} parent=63 // pred_check_branch
          %422 = sbr.rel (%p420) target = $region76
        $region75: #{distance_adaptive_weight_network.1} parent=63 // pred_region
          %424 = dma.done [#allocation6], 2048
        $region76: #{distance_adaptive_weight_network.1} parent=63 // pred_fallthru
          _
        // Predicated region
        $region77: #{distance_adaptive_weight_network.1} parent=63 // pred_check
          %p425 = pneg %p155
        $region78: #{distance_adaptive_weight_network.1} parent=63 // pred_check_branch
          %427 = sbr.rel (%p425) target = $region80
        $region79: #{distance_adaptive_weight_network.1} parent=63 // pred_region
          %429 = dma.done [#allocation9], 2048
        $region80: #{distance_adaptive_weight_network.1} parent=63 // pred_fallthru
          _
        // Predicated region
        $region81: #{distance_adaptive_weight_network.1} parent=63 // pred_check
          %p430 = pneg %p197
        $region82: #{distance_adaptive_weight_network.1} parent=63 // pred_check_branch
          %432 = sbr.rel (%p430) target = $region84
        $region83: #{distance_adaptive_weight_network.1} parent=63 // pred_region
          %434 = dma.done [#allocation9], 1024
        $region84: #{distance_adaptive_weight_network.1} parent=63 // pred_fallthru
          _
        %s435 = sand.u32 %s37, 1
        %s436 = scalar_lea.sflag [#allocation4], %s435
        %s437 = sand.u32 %s37, 1
        %s438 = smul.addr %s437, 8
        %s439 = scalar_lea.vmem [#allocation3], %s438
        %p440 = pneg %p50
        %p441 = pneg %p47
        %p442 = pneg %p71
        %p443 = pneg %p68
        %p444 = pneg %p92
        %p445 = pneg %p89
        %p446 = pneg %p113
        %p447 = pneg %p110
        %p448 = pneg %p134
        %p449 = pneg %p131
        %p450 = pneg %p155
        %p451 = pneg %p152
        %p452 = pneg %p176
        %p453 = pneg %p173
        %p454 = pneg %p197
        %p455 = pneg %p194
        %p456 = pneg %p218
        %p457 = pneg %p215
        %p458 = pneg %p239
        %p459 = pneg %p236
        %p460 = pneg %p260
        %p461 = pneg %p257
        %p462 = pneg %p286
        %p463 = pneg %p283
        %p464 = scmp.lt.s32.totalorder %s29, 1
        %s465 = scalar_select %p464, %s29, 1
        %s466 = scalar_lea.vmem %s11, %s465
        %p467 = scmp.lt.s32.totalorder %s29, 1
        %s468 = scalar_select %p467, %s29, 1
        %s469 = scalar_lea.vmem %s11, %s468
        %v471 = vld [vmem:[%s409] sm:$0xff]
        %v472 = vpack.c.bf16 %v471, %v471
        %v473 = vld [vmem:[#allocation5] sm:$0xf]
        %v474 = vld [vmem:[#allocation5 + $0x4] sm:$0xf]
        %v475 = vld [vmem:[#allocation5 + $0x8] sm:$0xf]
        %v476 = vld [vmem:[#allocation5 + $0xc] sm:$0x1]
        %v477 = vld [vmem:[%s2] sm:$0x1]
        %v479 = vperm.slane %v477, 0
        %v485 = vunpack.c.l.b16 %v473
        %v486 = vunpack.c.l.b16 %v474
        %v487 = vunpack.c.l.b16 %v475
        %v488 = vunpack.c.l.b16 %v476
        %v489 = vpack.c.b16 %v486, %v485
        %v490 = vpack.c.b16 %v488, %v487
        %vm492 = vcmask 203776
        %v494 = vsel %vm492, %v472, 0
        %vm496 = vcmask 1043456
        %vm497 = vcmask 1044480
        %v498 = vsel %vm496, 4294967295, 65535
        %v499 = vsel %vm497, %v498, 0
        %v501 = vand.u32 %v490, %v499
        %503 = vmatpush.bf16.msra.mxu0 0
        %504 = vmatpush.bf16.msra.mxu0 0
        %505 = vmatpush.bf16.msra.mxu0 0
        %506 = vmatpush.bf16.msra.mxu0 0
        %507 = vmatpush.bf16.msra.mxu0 0
        %508 = vmatpush.bf16.msra.mxu0 0
        %509 = vmatpush.bf16.msra.mxu0 %v501
        %510 = vmatpush.bf16.msra.mxu0 %v489
        %511 = vmatmul.bf16.gmra.mxu0 %v494
        %v512 = vpop.f32.mrf.mxu0
        %v513 = vadd.f32 %v479, %v512
        %v514 = vpop.f32.mrf.mxu0
        %515 = vdwg.mxu0
        %v516 = vmax.f32 %v513, 0.0
        %v517 = vpack.c.bf16 %v516, %v516
        %v518 = vld [vmem:[#allocation7] sm:$0xff]
        %v519 = vld [vmem:[#allocation7 + $0x8] sm:$0xff]
        %v520 = vld [vmem:[#allocation7 + $0x10] sm:$0xff]
        %v521 = vld [vmem:[#allocation7 + $0x18] sm:$0xff]
        %v522 = vld [vmem:[#allocation7 + $0x20] sm:$0xff]
        %v523 = vld [vmem:[#allocation7 + $0x28] sm:$0xff]
        %v524 = vld [vmem:[#allocation7 + $0x30] sm:$0xff]
        %v525 = vld [vmem:[#allocation7 + $0x38] sm:$0xff]
        %v526 = vld [vmem:[#allocation7 + $0x40] sm:$0xff]
        %v527 = vld [vmem:[#allocation7 + $0x48] sm:$0xff]
        %v528 = vld [vmem:[#allocation7 + $0x50] sm:$0xff]
        %v529 = vld [vmem:[#allocation7 + $0x58] sm:$0xff]
        %v530 = vld [vmem:[#allocation7 + $0x60] sm:$0xff]
        %v531 = vld [vmem:[#allocation7 + $0x68] sm:$0xff]
        %v532 = vld [vmem:[#allocation7 + $0x70] sm:$0xff]
        %v533 = vld [vmem:[#allocation7 + $0x78] sm:$0xff]
        %v534 = vld [vmem:[%s4] sm:$0x3]
        %v536 = vperm.slane %v534, 0
        %v537 = vperm.slane %v534, 1
        %v556 = vunpack.c.l.b16 %v518
        %v557 = vunpack.c.h.b16 %v518
        %v558 = vunpack.c.l.b16 %v519
        %v559 = vunpack.c.h.b16 %v519
        %v560 = vunpack.c.l.b16 %v520
        %v561 = vunpack.c.h.b16 %v520
        %v562 = vunpack.c.l.b16 %v521
        %v563 = vunpack.c.h.b16 %v521
        %v564 = vunpack.c.l.b16 %v522
        %v565 = vunpack.c.h.b16 %v522
        %v566 = vunpack.c.l.b16 %v523
        %v567 = vunpack.c.h.b16 %v523
        %v568 = vunpack.c.l.b16 %v524
        %v569 = vunpack.c.h.b16 %v524
        %v570 = vunpack.c.l.b16 %v525
        %v571 = vunpack.c.h.b16 %v525
        %v572 = vunpack.c.l.b16 %v526
        %v573 = vunpack.c.h.b16 %v526
        %v574 = vunpack.c.l.b16 %v527
        %v575 = vunpack.c.h.b16 %v527
        %v576 = vunpack.c.l.b16 %v528
        %v577 = vunpack.c.h.b16 %v528
        %v578 = vunpack.c.l.b16 %v529
        %v579 = vunpack.c.h.b16 %v529
        %v580 = vunpack.c.l.b16 %v530
        %v581 = vunpack.c.h.b16 %v530
        %v582 = vunpack.c.l.b16 %v531
        %v583 = vunpack.c.h.b16 %v531
        %v584 = vunpack.c.l.b16 %v532
        %v585 = vunpack.c.h.b16 %v532
        %v586 = vunpack.c.l.b16 %v533
        %v587 = vunpack.c.h.b16 %v533
        %v588 = vpack.c.b16 %v558, %v556
        %v589 = vpack.c.b16 %v559, %v557
        %v590 = vpack.c.b16 %v562, %v560
        %v591 = vpack.c.b16 %v563, %v561
        %v592 = vpack.c.b16 %v566, %v564
        %v593 = vpack.c.b16 %v567, %v565
        %v594 = vpack.c.b16 %v570, %v568
        %v595 = vpack.c.b16 %v571, %v569
        %v596 = vpack.c.b16 %v574, %v572
        %v597 = vpack.c.b16 %v575, %v573
        %v598 = vpack.c.b16 %v578, %v576
        %v599 = vpack.c.b16 %v579, %v577
        %v600 = vpack.c.b16 %v582, %v580
        %v601 = vpack.c.b16 %v583, %v581
        %v602 = vpack.c.b16 %v586, %v584
        %v603 = vpack.c.b16 %v587, %v585
        %620 = vmatpush.bf16.msra.mxu0 %v602
        %621 = vmatpush.bf16.msra.mxu0 %v600
        %622 = vmatpush.bf16.msra.mxu0 %v598
        %623 = vmatpush.bf16.msra.mxu0 %v596
        %624 = vmatpush.bf16.msra.mxu0 %v594
        %625 = vmatpush.bf16.msra.mxu0 %v592
        %626 = vmatpush.bf16.msra.mxu0 %v590
        %627 = vmatpush.bf16.msra.mxu0 %v588
        %628 = vmatmul.bf16.gmra.mxu0 %v517
        %v629 = vpop.f32.mrf.mxu0
        %v630 = vadd.f32 %v536, %v629
        %v631 = vpop.f32.mrf.mxu0
        %632 = vdwg.mxu0
        %633 = vmatpush.bf16.msra.mxu0 %v603
        %634 = vmatpush.bf16.msra.mxu0 %v601
        %635 = vmatpush.bf16.msra.mxu0 %v599
        %636 = vmatpush.bf16.msra.mxu0 %v597
        %637 = vmatpush.bf16.msra.mxu0 %v595
        %638 = vmatpush.bf16.msra.mxu0 %v593
        %639 = vmatpush.bf16.msra.mxu0 %v591
        %640 = vmatpush.bf16.msra.mxu0 %v589
        %641 = vmatmul.bf16.gmra.mxu0 %v517
        %v642 = vpop.f32.mrf.mxu0
        %v643 = vadd.f32 %v537, %v642
        %v644 = vpop.f32.mrf.mxu0
        %645 = vdwg.mxu0
        %v646 = vmax.f32 %v630, 0.0
        %v647 = vmax.f32 %v643, 0.0
        %v648 = vpack.c.bf16 %v646, %v646
        %v649 = vpack.c.bf16 %v647, %v647
        %v650 = vld [vmem:[#allocation8] sm:$0xf]
        %v651 = vld [vmem:[#allocation8 + $0x4] sm:$0xf]
        %v652 = vld [vmem:[#allocation8 + $0x8] sm:$0xf]
        %v653 = vld [vmem:[#allocation8 + $0xc] sm:$0xf]
        %v654 = vld [vmem:[#allocation8 + $0x10] sm:$0xf]
        %v655 = vld [vmem:[#allocation8 + $0x14] sm:$0xf]
        %v656 = vld [vmem:[#allocation8 + $0x18] sm:$0xf]
        %v657 = vld [vmem:[#allocation8 + $0x1c] sm:$0xf]
        %v658 = vld [vmem:[#allocation8 + $0x20] sm:$0xf]
        %v659 = vld [vmem:[#allocation8 + $0x24] sm:$0xf]
        %v660 = vld [vmem:[#allocation8 + $0x28] sm:$0xf]
        %v661 = vld [vmem:[#allocation8 + $0x2c] sm:$0xf]
        %v662 = vld [vmem:[#allocation8 + $0x30] sm:$0xf]
        %v663 = vld [vmem:[#allocation8 + $0x34] sm:$0xf]
        %v664 = vld [vmem:[#allocation8 + $0x38] sm:$0xf]
        %v665 = vld [vmem:[#allocation8 + $0x3c] sm:$0xf]
        %v666 = vld [vmem:[#allocation8 + $0x40] sm:$0xf]
        %v667 = vld [vmem:[#allocation8 + $0x44] sm:$0xf]
        %v668 = vld [vmem:[#allocation8 + $0x48] sm:$0xf]
        %v669 = vld [vmem:[#allocation8 + $0x4c] sm:$0xf]
        %v670 = vld [vmem:[#allocation8 + $0x50] sm:$0xf]
        %v671 = vld [vmem:[#allocation8 + $0x54] sm:$0xf]
        %v672 = vld [vmem:[#allocation8 + $0x58] sm:$0xf]
        %v673 = vld [vmem:[#allocation8 + $0x5c] sm:$0xf]
        %v674 = vld [vmem:[#allocation8 + $0x60] sm:$0xf]
        %v675 = vld [vmem:[#allocation8 + $0x64] sm:$0xf]
        %v676 = vld [vmem:[#allocation8 + $0x68] sm:$0xf]
        %v677 = vld [vmem:[#allocation8 + $0x6c] sm:$0xf]
        %v678 = vld [vmem:[#allocation8 + $0x70] sm:$0xf]
        %v679 = vld [vmem:[#allocation8 + $0x74] sm:$0xf]
        %v680 = vld [vmem:[#allocation8 + $0x78] sm:$0xf]
        %v681 = vld [vmem:[#allocation8 + $0x7c] sm:$0xf]
        %v682 = vld [vmem:[%s6] sm:$0x1]
        %v684 = vperm.slane %v682, 0
        %v718 = vunpack.c.l.b16 %v650
        %v719 = vunpack.c.l.b16 %v651
        %v720 = vunpack.c.l.b16 %v652
        %v721 = vunpack.c.l.b16 %v653
        %v722 = vunpack.c.l.b16 %v654
        %v723 = vunpack.c.l.b16 %v655
        %v724 = vunpack.c.l.b16 %v656
        %v725 = vunpack.c.l.b16 %v657
        %v726 = vunpack.c.l.b16 %v658
        %v727 = vunpack.c.l.b16 %v659
        %v728 = vunpack.c.l.b16 %v660
        %v729 = vunpack.c.l.b16 %v661
        %v730 = vunpack.c.l.b16 %v662
        %v731 = vunpack.c.l.b16 %v663
        %v732 = vunpack.c.l.b16 %v664
        %v733 = vunpack.c.l.b16 %v665
        %v734 = vunpack.c.l.b16 %v666
        %v735 = vunpack.c.l.b16 %v667
        %v736 = vunpack.c.l.b16 %v668
        %v737 = vunpack.c.l.b16 %v669
        %v738 = vunpack.c.l.b16 %v670
        %v739 = vunpack.c.l.b16 %v671
        %v740 = vunpack.c.l.b16 %v672
        %v741 = vunpack.c.l.b16 %v673
        %v742 = vunpack.c.l.b16 %v674
        %v743 = vunpack.c.l.b16 %v675
        %v744 = vunpack.c.l.b16 %v676
        %v745 = vunpack.c.l.b16 %v677
        %v746 = vunpack.c.l.b16 %v678
        %v747 = vunpack.c.l.b16 %v679
        %v748 = vunpack.c.l.b16 %v680
        %v749 = vunpack.c.l.b16 %v681
        %v750 = vpack.c.b16 %v719, %v718
        %v751 = vpack.c.b16 %v721, %v720
        %v752 = vpack.c.b16 %v723, %v722
        %v753 = vpack.c.b16 %v725, %v724
        %v754 = vpack.c.b16 %v727, %v726
        %v755 = vpack.c.b16 %v729, %v728
        %v756 = vpack.c.b16 %v731, %v730
        %v757 = vpack.c.b16 %v733, %v732
        %v758 = vpack.c.b16 %v735, %v734
        %v759 = vpack.c.b16 %v737, %v736
        %v760 = vpack.c.b16 %v739, %v738
        %v761 = vpack.c.b16 %v741, %v740
        %v762 = vpack.c.b16 %v743, %v742
        %v763 = vpack.c.b16 %v745, %v744
        %v764 = vpack.c.b16 %v747, %v746
        %v765 = vpack.c.b16 %v749, %v748
        %782 = vmatpush.bf16.msra.mxu0 %v757
        %783 = vmatpush.bf16.msra.mxu0 %v756
        %784 = vmatpush.bf16.msra.mxu0 %v755
        %785 = vmatpush.bf16.msra.mxu0 %v754
        %786 = vmatpush.bf16.msra.mxu0 %v753
        %787 = vmatpush.bf16.msra.mxu0 %v752
        %788 = vmatpush.bf16.msra.mxu0 %v751
        %789 = vmatpush.bf16.msra.mxu0 %v750
        %790 = vmatmul.bf16.gmra.mxu0 %v648
        %v791 = vpop.f32.mrf.mxu0
        %v792 = vadd.f32 %v684, %v791
        %v793 = vpop.f32.mrf.mxu0
        %794 = vdwg.mxu0
        %795 = vmatpush.bf16.msra.mxu0 %v765
        %796 = vmatpush.bf16.msra.mxu0 %v764
        %797 = vmatpush.bf16.msra.mxu0 %v763
        %798 = vmatpush.bf16.msra.mxu0 %v762
        %799 = vmatpush.bf16.msra.mxu0 %v761
        %800 = vmatpush.bf16.msra.mxu0 %v760
        %801 = vmatpush.bf16.msra.mxu0 %v759
        %802 = vmatpush.bf16.msra.mxu0 %v758
        %803 = vmatmul.bf16.gmra.mxu0 %v649
        %v804 = vpop.f32.mrf.mxu0
        %v805 = vadd.f32 %v792, %v804
        %v806 = vpop.f32.mrf.mxu0
        %807 = vdwg.mxu0
        %v808 = vmax.f32 %v805, 0.0
        %v809 = vpack.c.bf16 %v808, %v808
        %v810 = vld [vmem:[#allocation10] sm:$0xf]
        %v811 = vld [vmem:[#allocation10 + $0x4] sm:$0xf]
        %v812 = vld [vmem:[#allocation10 + $0x8] sm:$0xf]
        %v813 = vld [vmem:[#allocation10 + $0xc] sm:$0xf]
        %v814 = vld [vmem:[#allocation10 + $0x10] sm:$0xf]
        %v815 = vld [vmem:[#allocation10 + $0x14] sm:$0xf]
        %v816 = vld [vmem:[#allocation10 + $0x18] sm:$0xf]
        %v817 = vld [vmem:[#allocation10 + $0x1c] sm:$0xf]
        %v818 = vld [vmem:[#allocation10 + $0x20] sm:$0xf]
        %v819 = vld [vmem:[#allocation10 + $0x24] sm:$0xf]
        %v820 = vld [vmem:[#allocation10 + $0x28] sm:$0xf]
        %v821 = vld [vmem:[#allocation10 + $0x2c] sm:$0xf]
        %v822 = vld [vmem:[#allocation10 + $0x30] sm:$0xf]
        %v823 = vld [vmem:[#allocation10 + $0x34] sm:$0xf]
        %v824 = vld [vmem:[#allocation10 + $0x38] sm:$0xf]
        %v825 = vld [vmem:[#allocation10 + $0x3c] sm:$0xf]
        %v826 = vld [vmem:[%s8] sm:$0x1]
        %v828 = vperm.slane %v826, 0
        %v846 = vunpack.c.l.b16 %v810
        %v847 = vunpack.c.l.b16 %v811
        %v848 = vunpack.c.l.b16 %v812
        %v849 = vunpack.c.l.b16 %v813
        %v850 = vunpack.c.l.b16 %v814
        %v851 = vunpack.c.l.b16 %v815
        %v852 = vunpack.c.l.b16 %v816
        %v853 = vunpack.c.l.b16 %v817
        %v854 = vunpack.c.l.b16 %v818
        %v855 = vunpack.c.l.b16 %v819
        %v856 = vunpack.c.l.b16 %v820
        %v857 = vunpack.c.l.b16 %v821
        %v858 = vunpack.c.l.b16 %v822
        %v859 = vunpack.c.l.b16 %v823
        %v860 = vunpack.c.l.b16 %v824
        %v861 = vunpack.c.l.b16 %v825
        %v862 = vpack.c.b16 %v847, %v846
        %v863 = vpack.c.b16 %v849, %v848
        %v864 = vpack.c.b16 %v851, %v850
        %v865 = vpack.c.b16 %v853, %v852
        %v866 = vpack.c.b16 %v855, %v854
        %v867 = vpack.c.b16 %v857, %v856
        %v868 = vpack.c.b16 %v859, %v858
        %v869 = vpack.c.b16 %v861, %v860
        %878 = vmatpush.bf16.msra.mxu0 %v869
        %879 = vmatpush.bf16.msra.mxu0 %v868
        %880 = vmatpush.bf16.msra.mxu0 %v867
        %881 = vmatpush.bf16.msra.mxu0 %v866
        %882 = vmatpush.bf16.msra.mxu0 %v865
        %883 = vmatpush.bf16.msra.mxu0 %v864
        %884 = vmatpush.bf16.msra.mxu0 %v863
        %885 = vmatpush.bf16.msra.mxu0 %v862
        %886 = vmatmul.bf16.gmra.mxu0 %v809
        %v887 = vpop.f32.mrf.mxu0
        %v888 = vadd.f32 %v828, %v887
        %v889 = vpop.f32.mrf.mxu0
        %890 = vdwg.mxu0
        %v891 = vmax.f32 %v888, 0.0
        %v892 = vpack.c.bf16 %v891, %v891
        %v893 = vld [vmem:[%s9] sm:$0x1]
        %v894 = vld [vmem:[#allocation2] sm:$0x1]
        %896 = vset.pattern.permute.xlu0 0
        %897 = vperm.xlu0 %896, %v894
        %v898 = vpop.permute.xlu0 %897
        %v900 = vperm.slane %v898, 0
        %901 = vmatpush.bf16.xpose.msra.mxu0 0
        %902 = vmatpush.bf16.xpose.msra.mxu0 0
        %903 = vmatpush.bf16.xpose.msra.mxu0 0
        %904 = vmatpush.bf16.xpose.msra.mxu0 0
        %905 = vmatpush.bf16.xpose.msra.mxu0 0
        %906 = vmatpush.bf16.xpose.msra.mxu0 0
        %907 = vmatpush.bf16.xpose.msra.mxu0 0
        %908 = vmatpush.bf16.xpose.msra.mxu0 %v892
        %909 = vmatmul.bf16.gmra.mxu0 %v893
        %v910 = vpop.f32.mrf.mxu0
        %v911 = vadd.f32 %v900, %v910
        %v912 = vpop.f32.mrf.mxu0
        %913 = vdwg.mxu0
        %v914 = vmax.f32 %v911, 0.0
        %vm915 = vcmask 57344
        %916 = vst.msk [vmem:[%s469] sm:$0x1] %vm915, %v914
        %p917 = scmp.lt.s32.totalorder %s29, 1
        %s918 = scalar_select %p917, %s29, 1
        %s919 = scalar_lea.vmem %s11, %s918
        // Predicated region
        $region85: #{distance_adaptive_weight_network.1} parent=63 // pred_check
          %p920 = pneg %p283
        $region86: #{distance_adaptive_weight_network.1} parent=63 // pred_check_branch
          %922 = sbr.rel (%p920) target = $region88
        $region87: #{distance_adaptive_weight_network.1} parent=63 // pred_region
          _
        $region88: #{distance_adaptive_weight_network.1} parent=63 // pred_fallthru
          _
      $region64: #{distance_adaptive_weight_network.1} parent=5 // pred_fallthru
        _
      %p923 = scmp.le.s32.totalorder 2, %s24
      // Predicated region
      $region89: #{distance_adaptive_weight_network.1} parent=5 // pred_check
        %p924 = pneg %p923
      $region90: #{distance_adaptive_weight_network.1} parent=5 // pred_check_branch
        %926 = sbr.rel (%p924) target = $region92
      $region91: #{distance_adaptive_weight_network.1} parent=5 // pred_region
        %s927 = ssub.s32 %s24, 2
        // Predicated region
        $region93: #{distance_adaptive_weight_network.1} parent=91 // pred_check
          %p928 = pneg %p289
        $region94: #{distance_adaptive_weight_network.1} parent=91 // pred_check_branch
          %930 = sbr.rel (%p928) target = $region96
        $region95: #{distance_adaptive_weight_network.1} parent=91 // pred_region
          %p931 = scmp.lt.s32.totalorder %s30, 1
          %s932 = scalar_select %p931, %s30, 1
          %s933 = scalar_lea.vmem %s11, %s932
        $region96: #{distance_adaptive_weight_network.1} parent=91 // pred_fallthru
          _
      $region92: #{distance_adaptive_weight_network.1} parent=5 // pred_fallthru
        _
    $region6: #{distance_adaptive_weight_network.1} parent=1 // loop_footer
      %s28 = sadd.s32 1, %s24
    $region7: #{distance_adaptive_weight_network.1} parent=1 // loop_footer_branch
      %23 = sbr.rel target = $region3
    $region8: #{distance_adaptive_weight_network.1} parent=1 // loop_exit
      _
    %934 = vsyncpa [#allocation4], 1
    %s935 = scalar_lea.sflag [#allocation4], 1
    %936 = vsyncpa %s935, 1
    %937 = vsyncpa [#allocation6], 1
    %938 = vsyncpa [#allocation9], 1

</llo_original>
